<compile_context>
chip_gen: v6e
topology: v6e:2x2x1
jax: 0.10.0
libtpu: 0.0.40
codegen_flags: <defaults>
</compile_context>

<pallas_src>
import functools
import math

import jax
import jax.numpy as jnp
from jax import lax
from jax.experimental import pallas as pl
from jax.experimental.pallas import tpu as pltpu

_HALF_LOG_2PI = 0.5 * math.log(2.0 * math.pi)


def _linear_bbb_kernel(x_ref, wmu_ref, wrho_ref, weps_ref,
                       bmu_ref, brho_ref, beps_ref,
                       y_ref, lp_ref, lq_ref,
                       acc_smem,
                       *, prior_loc, inv_two_prior_var):
    """Grid = (out_tiles, in_tiles); the In axis (axis 1) is the reduction."""
    k = pl.program_id(1)
    k_last = pl.num_programs(1) - 1

    w_mu = wmu_ref[...]          # (TO, TI)
    w_rho = wrho_ref[...]        # (TO, TI)
    w_eps = weps_ref[...]        # (TO, TI)

    # softplus exactly as torch.log(1 + torch.exp(rho)); one exp + one log1p per element (EUP).
    w_sigma = jnp.log1p(jnp.exp(w_rho))

    # Reparameterized weight sample.
    w = w_mu + w_sigma * w_eps

    # Variable part of the prior log-density: -0.5*(w - loc)^2 / scale^2.
    # The constant -(log(scale) + 0.5*log(2*pi)) per element is folded in the wrapper.
    dw = w - prior_loc
    lp_tile = -inv_two_prior_var * jnp.sum(dw * dw)

    # Posterior log-density simplifies: (w - mu) = sigma*eps, so the quadratic is -0.5*eps^2.
    # The constant -0.5*log(2*pi) per element is folded in the wrapper.
    lq_tile = -0.5 * jnp.sum(w_eps * w_eps) - jnp.sum(jnp.log(w_sigma))

    # F.linear: contract the In axis of x (B, TI) against the In axis of w (TO, TI) directly
    # on the MXU -- no transposed copy of the weight tile.
    part = lax.dot_general(
        x_ref[...], w,
        dimension_numbers=(((1,), (1,)), ((), ())),
        preferred_element_type=jnp.float32)

    @pl.when(k == 0)
    def _():
        # Bias sample + its log-prob contributions, computed once per Out tile.
        b_mu = bmu_ref[...]      # (1, TO)
        b_rho = brho_ref[...]
        b_eps = beps_ref[...]
        b_sigma = jnp.log1p(jnp.exp(b_rho))
        b = b_mu + b_sigma * b_eps

        db = b - prior_loc
        acc_smem[0] = -inv_two_prior_var * jnp.sum(db * db)
        acc_smem[1] = -0.5 * jnp.sum(b_eps * b_eps) - jnp.sum(jnp.log(b_sigma))

        # Initialize the resident y tile directly with (first partial matmul + bias broadcast):
        # no separate zero-init pass and no bias-add pass at the last reduction step.
        y_ref[...] = part + b

    @pl.when(k > 0)
    def _():
        y_ref[...] += part

    acc_smem[0] += lp_tile
    acc_smem[1] += lq_tile

    @pl.when(k == k_last)
    def _():
        # Lane-dense partial outputs: one full (8, 128) vreg store per Out tile (unmasked vst).
        lp_ref[...] = jnp.full(lp_ref.shape, acc_smem[0], dtype=lp_ref.dtype)
        lq_ref[...] = jnp.full(lq_ref.shape, acc_smem[1], dtype=lq_ref.dtype)


def _pick_tile(dim, max_tile):
    """Largest multiple of 128 <= max_tile that evenly divides dim, else the full dim."""
    if dim <= max_tile:
        return dim
    t = (max_tile // 128) * 128
    while t >= 128:
        if dim % t == 0:
            return t
        t -= 128
    # TODO(synk): pad/mask dims that are not multiples of 128 instead of falling back to full.
    return dim


def linear_bbb_forward(x, w_mu, w_rho, b_mu, b_rho, w_eps, b_eps, prior_var=1.0,
                       *, max_tile_out=512, max_tile_in=1024):
    """Linear_BBB.forward.  Returns (y, log_prior, log_post).

    Default tile caps (512, 1024) keep 3 weight streams x 2 pipeline buffers ~ 12 MiB,
    safe for v7x's 64 MiB VMEM; raise them on v5e/v6e (128 MiB) if desired.
    The batch is kept as a single block (typical BNN batch sizes are small).
    TODO(synk): add a batch grid axis (with the log-prob sums gated to one batch tile) if
                very large batches are needed.
    """
    out_f, in_f = w_mu.shape
    B = x.shape[0]

    f32 = jnp.float32
    x = x.astype(f32)
    w_mu = w_mu.astype(f32)
    w_rho = w_rho.astype(f32)
    w_eps = w_eps.astype(f32)
    b_mu2 = b_mu.reshape(1, out_f).astype(f32)
    b_rho2 = b_rho.reshape(1, out_f).astype(f32)
    b_eps2 = b_eps.reshape(1, out_f).astype(f32)

    to = _pick_tile(out_f, max_tile_out)
    ti = _pick_tile(in_f, max_tile_in)
    n_o = out_f // to
    n_k = in_f // ti

    # The torch module passes its "prior_var" argument as the Normal scale (std); reproduce that.
    prior_loc = 0.5
    prior_scale = float(prior_var)
    inv_two_prior_var = 1.0 / (2.0 * prior_scale * prior_scale)

    kernel = functools.partial(
        _linear_bbb_kernel,
        prior_loc=float(prior_loc),                # plain Python floats -> folded immediates
        inv_two_prior_var=float(inv_two_prior_var))

    grid_spec = pltpu.PrefetchScalarGridSpec(
        num_scalar_prefetch=0,
        grid=(n_o, n_k),
        in_specs=[
            pl.BlockSpec((B, ti), lambda o, k: (0, k)),     # x
            pl.BlockSpec((to, ti), lambda o, k: (o, k)),    # w_mu
            pl.BlockSpec((to, ti), lambda o, k: (o, k)),    # w_rho
            pl.BlockSpec((to, ti), lambda o, k: (o, k)),    # w_eps
            pl.BlockSpec((1, to), lambda o, k: (0, o)),     # b_mu
            pl.BlockSpec((1, to), lambda o, k: (0, o)),     # b_rho
            pl.BlockSpec((1, to), lambda o, k: (0, o)),     # b_eps
        ],
        out_specs=[
            pl.BlockSpec((B, to), lambda o, k: (0, o)),     # y (resident / accumulated over k)
            pl.BlockSpec((8, 128), lambda o, k: (o, 0)),    # log_prior partial per Out tile
            pl.BlockSpec((8, 128), lambda o, k: (o, 0)),    # log_post partial per Out tile
        ],
        scratch_shapes=[pltpu.SMEM((2,), jnp.float32)],     # [log_prior_acc, log_post_acc]
    )

    y, lp_part, lq_part = pl.pallas_call(
        kernel,
        grid_spec=grid_spec,
        out_shape=[
            jax.ShapeDtypeStruct((B, out_f), jnp.float32),
            jax.ShapeDtypeStruct((n_o * 8, 128), jnp.float32),
            jax.ShapeDtypeStruct((n_o * 8, 128), jnp.float32),
        ],
        compiler_params=pltpu.CompilerParams(
            dimension_semantics=("parallel", "arbitrary")),
    )(x, w_mu, w_rho, w_eps, b_mu2, b_rho2, b_eps2)

    # Fold the constant terms of the Gaussian log-densities (hoisted out of the kernel).
    n_params = out_f * in_f + out_f
    log_prior = jnp.sum(lp_part[0::8, 0]) - n_params * (math.log(prior_scale) + _HALF_LOG_2PI)
    log_post = jnp.sum(lq_part[0::8, 0]) - n_params * _HALF_LOG_2PI
    return y, log_prior, log_post


# ---------------------------------------------------------------------------
# Pure-JAX reference (direct transcription of Linear_BBB.forward)
# ---------------------------------------------------------------------------
def _gauss_log_prob(v, loc, scale):
    var = scale * scale
    return -((v - loc) ** 2) / (2.0 * var) - jnp.log(scale) - 0.5 * jnp.log(2.0 * jnp.pi)


def _reference(x, w_mu, w_rho, b_mu, b_rho, w_eps, b_eps, prior_var=1.0):
    w_sigma = jnp.log1p(jnp.exp(w_rho))
    b_sigma = jnp.log1p(jnp.exp(b_rho))
    w = w_mu + w_sigma * w_eps
    b = b_mu + b_sigma * b_eps
    lp = (jnp.sum(_gauss_log_prob(w, 0.5, prior_var)) +
          jnp.sum(_gauss_log_prob(b, 0.5, prior_var)))
    lq = (jnp.sum(_gauss_log_prob(w, w_mu, w_sigma)) +
          jnp.sum(_gauss_log_prob(b, b_mu, b_sigma)))
    y = x @ w.T + b
    return y, lp, lq


if __name__ == "__main__":
    root = jax.random.PRNGKey(0)

    def run_case(batch, in_f, out_f, zero_params, max_tile_out, max_tile_in, key):
        ks = jax.random.split(key, 7)
        x = jax.random.normal(ks[0], (batch, in_f), dtype=jnp.float32)
        if zero_params:  # exactly as the module's __init__ (all-zero parameters)
            w_mu = jnp.zeros((out_f, in_f), jnp.float32)
            w_rho = jnp.zeros((out_f, in_f), jnp.float32)
            b_mu = jnp.zeros((out_f,), jnp.float32)
            b_rho = jnp.zeros((out_f,), jnp.float32)
        else:
            w_mu = 0.1 * jax.random.normal(ks[1], (out_f, in_f), dtype=jnp.float32)
            w_rho = 0.5 * jax.random.normal(ks[2], (out_f, in_f), dtype=jnp.float32)
            b_mu = 0.1 * jax.random.normal(ks[3], (out_f,), dtype=jnp.float32)
            b_rho = 0.5 * jax.random.normal(ks[4], (out_f,), dtype=jnp.float32)

        # Normal(0.5, 1).sample(...) -- shared between kernel and reference.
        w_eps = 0.5 + jax.random.normal(ks[5], (out_f, in_f), dtype=jnp.float32)
        b_eps = 0.5 + jax.random.normal(ks[6], (out_f,), dtype=jnp.float32)

        y, lp, lq = linear_bbb_forward(
            x, w_mu, w_rho, b_mu, b_rho, w_eps, b_eps, prior_var=1.0,
            max_tile_out=max_tile_out, max_tile_in=max_tile_in)
        jax.block_until_ready((y, lp, lq))

        y_ref, lp_ref, lq_ref = _reference(x, w_mu, w_rho, b_mu, b_rho,
                                           w_eps, b_eps, prior_var=1.0)
        assert jnp.allclose(y, y_ref, atol=1e-2, rtol=5e-3), "y mismatch"
        assert jnp.allclose(lp, lp_ref, atol=1e-1, rtol=1e-4), "log_prior mismatch"
        assert jnp.allclose(lq, lq_ref, atol=1e-1, rtol=1e-4), "log_post mismatch"

    k1, k2 = jax.random.split(root)
    # Tiny shapes matching a Linear_BBB(32, 16) with fresh (zero) parameters: grid (1, 1).
    run_case(batch=8, in_f=32, out_f=16, zero_params=True,
             max_tile_out=512, max_tile_in=1024, key=k1)
    # Moderate shapes exercising the tiled/accumulating path: grid (2, 2), tiles (128, 256).
    run_case(batch=8, in_f=512, out_f=256, zero_params=False,
             max_tile_out=128, max_tile_in=256, key=k2)

    print("KERNEL_OK")
</pallas_src>

<mosaic_0001>
module attributes {stable_mosaic.version = 11 : i64} {
  func.func @_linear_bbb_kernel(%arg0: i32, %arg1: i32, %arg2: memref<8x32xf32, #tpu.memory_space<vmem>>, %arg3: memref<16x32xf32, #tpu.memory_space<vmem>>, %arg4: memref<16x32xf32, #tpu.memory_space<vmem>>, %arg5: memref<16x32xf32, #tpu.memory_space<vmem>>, %arg6: memref<1x16xf32, #tpu.memory_space<vmem>>, %arg7: memref<1x16xf32, #tpu.memory_space<vmem>>, %arg8: memref<1x16xf32, #tpu.memory_space<vmem>>, %arg9: memref<8x16xf32, #tpu.memory_space<vmem>>, %arg10: memref<8x128xf32, #tpu.memory_space<vmem>>, %arg11: memref<8x128xf32, #tpu.memory_space<vmem>>, %arg12: memref<2xf32, #tpu.memory_space<smem>>) attributes {dimension_semantics = [#tpu.dimension_semantics<parallel>, #tpu.dimension_semantics<arbitrary>], iteration_bounds = array<i64: 1, 1>, scalar_prefetch = 0 : i64, scratch_operands = 1 : i64, tpu.core_type = #tpu.core_type<tc>, window_params = [{transform_indices = @transform_0, window_bounds = array<i64: 8, 32>}, {transform_indices = @transform_1, window_bounds = array<i64: 16, 32>}, {transform_indices = @transform_2, window_bounds = array<i64: 16, 32>}, {transform_indices = @transform_3, window_bounds = array<i64: 16, 32>}, {transform_indices = @transform_4, window_bounds = array<i64: 1, 16>}, {transform_indices = @transform_5, window_bounds = array<i64: 1, 16>}, {transform_indices = @transform_6, window_bounds = array<i64: 1, 16>}, {transform_indices = @transform_7, window_bounds = array<i64: 8, 16>}, {transform_indices = @transform_8, window_bounds = array<i64: 8, 128>}, {transform_indices = @transform_9, window_bounds = array<i64: 8, 128>}]} {
    %c0 = arith.constant 0 : index
    %c0_0 = arith.constant 0 : index
    %0 = vector.load %arg3[%c0, %c0_0] : memref<16x32xf32, #tpu.memory_space<vmem>>, vector<16x32xf32>
    %c0_1 = arith.constant 0 : index
    %c0_2 = arith.constant 0 : index
    %1 = vector.load %arg4[%c0_1, %c0_2] : memref<16x32xf32, #tpu.memory_space<vmem>>, vector<16x32xf32>
    %c0_3 = arith.constant 0 : index
    %c0_4 = arith.constant 0 : index
    %2 = vector.load %arg5[%c0_3, %c0_4] : memref<16x32xf32, #tpu.memory_space<vmem>>, vector<16x32xf32>
    %3 = math.exp %1 : vector<16x32xf32>
    %4 = math.log1p %3 : vector<16x32xf32>
    %5 = arith.mulf %4, %2 : vector<16x32xf32>
    %6 = arith.addf %0, %5 : vector<16x32xf32>
    %cst = arith.constant 5.000000e-01 : f32
    %7 = vector.broadcast %cst : f32 to vector<16x32xf32>
    %8 = arith.subf %6, %7 : vector<16x32xf32>
    %9 = arith.mulf %8, %8 : vector<16x32xf32>
    %10 = vector.shape_cast %9 : vector<16x32xf32> to vector<1x16x32xf32>
    %cst_5 = arith.constant dense<0.000000e+00> : vector<1xf32>
    %11 = vector.multi_reduction <add>, %10, %cst_5 [1, 2] : vector<1x16x32xf32> to vector<1xf32>
    %12 = vector.shape_cast %11 : vector<1xf32> to vector<1x1x1xf32>
    %13 = vector.extract %12[0, 0, 0] : f32 from vector<1x1x1xf32>
    %cst_6 = arith.constant -5.000000e-01 : f32
    %14 = arith.mulf %cst_6, %13 : f32
    %15 = arith.mulf %2, %2 : vector<16x32xf32>
    %16 = vector.shape_cast %15 : vector<16x32xf32> to vector<1x16x32xf32>
    %cst_7 = arith.constant dense<0.000000e+00> : vector<1xf32>
    %17 = vector.multi_reduction <add>, %16, %cst_7 [1, 2] : vector<1x16x32xf32> to vector<1xf32>
    %18 = vector.shape_cast %17 : vector<1xf32> to vector<1x1x1xf32>
    %19 = vector.extract %18[0, 0, 0] : f32 from vector<1x1x1xf32>
    %cst_8 = arith.constant -5.000000e-01 : f32
    %20 = arith.mulf %cst_8, %19 : f32
    %21 = math.log %4 : vector<16x32xf32>
    %22 = vector.shape_cast %21 : vector<16x32xf32> to vector<1x16x32xf32>
    %cst_9 = arith.constant dense<0.000000e+00> : vector<1xf32>
    %23 = vector.multi_reduction <add>, %22, %cst_9 [1, 2] : vector<1x16x32xf32> to vector<1xf32>
    %24 = vector.shape_cast %23 : vector<1xf32> to vector<1x1x1xf32>
    %25 = vector.extract %24[0, 0, 0] : f32 from vector<1x1x1xf32>
    %26 = arith.subf %20, %25 : f32
    %c0_10 = arith.constant 0 : index
    %c0_11 = arith.constant 0 : index
    %27 = vector.load %arg2[%c0_10, %c0_11] : memref<8x32xf32, #tpu.memory_space<vmem>>, vector<8x32xf32>
    %cst_12 = arith.constant dense<0.000000e+00> : vector<8x16xf32>
    %28 = tpu.matmul %27, %6, %cst_12 {dimension_numbers = #tpu.dot_dimension_numbers<[1], [1], [0], [0], [0, 0, 1, 0], [], []>} : vector<8x32xf32>, vector<16x32xf32>, vector<8x16xf32> -> vector<8x16xf32>
    %c0_i32 = arith.constant 0 : i32
    %29 = arith.cmpi eq, %arg1, %c0_i32 : i32
    %30 = arith.extui %29 : i1 to i32
    %c0_i32_13 = arith.constant 0 : i32
    %31 = arith.cmpi ne, %30, %c0_i32_13 : i32
    scf.if %31 {
      %c0_21 = arith.constant 0 : index
      %c0_22 = arith.constant 0 : index
      %44 = vector.load %arg6[%c0_21, %c0_22] : memref<1x16xf32, #tpu.memory_space<vmem>>, vector<1x16xf32>
      %c0_23 = arith.constant 0 : index
      %c0_24 = arith.constant 0 : index
      %45 = vector.load %arg7[%c0_23, %c0_24] : memref<1x16xf32, #tpu.memory_space<vmem>>, vector<1x16xf32>
      %c0_25 = arith.constant 0 : index
      %c0_26 = arith.constant 0 : index
      %46 = vector.load %arg8[%c0_25, %c0_26] : memref<1x16xf32, #tpu.memory_space<vmem>>, vector<1x16xf32>
      %47 = math.exp %45 : vector<1x16xf32>
      %48 = math.log1p %47 : vector<1x16xf32>
      %49 = arith.mulf %48, %46 : vector<1x16xf32>
      %50 = arith.addf %44, %49 : vector<1x16xf32>
      %cst_27 = arith.constant 5.000000e-01 : f32
      %51 = vector.broadcast %cst_27 : f32 to vector<1x16xf32>
      %52 = arith.subf %50, %51 : vector<1x16xf32>
      %53 = arith.mulf %52, %52 : vector<1x16xf32>
      %54 = vector.shape_cast %53 : vector<1x16xf32> to vector<1x1x16xf32>
      %cst_28 = arith.constant dense<0.000000e+00> : vector<1xf32>
      %55 = vector.multi_reduction <add>, %54, %cst_28 [1, 2] : vector<1x1x16xf32> to vector<1xf32>
      %56 = vector.shape_cast %55 : vector<1xf32> to vector<1x1x1xf32>
      %57 = vector.extract %56[0, 0, 0] : f32 from vector<1x1x1xf32>
      %cst_29 = arith.constant -5.000000e-01 : f32
      %58 = arith.mulf %cst_29, %57 : f32
      %c0_30 = arith.constant 0 : index
      %59 = memref.load %arg12[%c0_30] : memref<2xf32, #tpu.memory_space<smem>>
      memref.store %58, %arg12[%c0_30] : memref<2xf32, #tpu.memory_space<smem>>
      %60 = arith.mulf %46, %46 : vector<1x16xf32>
      %61 = vector.shape_cast %60 : vector<1x16xf32> to vector<1x1x16xf32>
      %cst_31 = arith.constant dense<0.000000e+00> : vector<1xf32>
      %62 = vector.multi_reduction <add>, %61, %cst_31 [1, 2] : vector<1x1x16xf32> to vector<1xf32>
      %63 = vector.shape_cast %62 : vector<1xf32> to vector<1x1x1xf32>
      %64 = vector.extract %63[0, 0, 0] : f32 from vector<1x1x1xf32>
      %cst_32 = arith.constant -5.000000e-01 : f32
      %65 = arith.mulf %cst_32, %64 : f32
      %66 = math.log %48 : vector<1x16xf32>
      %67 = vector.shape_cast %66 : vector<1x16xf32> to vector<1x1x16xf32>
      %cst_33 = arith.constant dense<0.000000e+00> : vector<1xf32>
      %68 = vector.multi_reduction <add>, %67, %cst_33 [1, 2] : vector<1x1x16xf32> to vector<1xf32>
      %69 = vector.shape_cast %68 : vector<1xf32> to vector<1x1x1xf32>
      %70 = vector.extract %69[0, 0, 0] : f32 from vector<1x1x1xf32>
      %71 = arith.subf %65, %70 : f32
      %c1_34 = arith.constant 1 : index
      %72 = memref.load %arg12[%c1_34] : memref<2xf32, #tpu.memory_space<smem>>
      memref.store %71, %arg12[%c1_34] : memref<2xf32, #tpu.memory_space<smem>>
      %73 = vector.broadcast %50 : vector<1x16xf32> to vector<8x16xf32>
      %74 = arith.addf %28, %73 : vector<8x16xf32>
      %c0_35 = arith.constant 0 : index
      %c0_36 = arith.constant 0 : index
      %75 = vector.load %arg9[%c0_35, %c0_36] : memref<8x16xf32, #tpu.memory_space<vmem>>, vector<8x16xf32>
      tpu.vector_store %arg9[%c0_35, %c0_36], %74 {strides = array<i32>} : memref<8x16xf32, #tpu.memory_space<vmem>>, vector<8x16xf32>,
    } else {
    }
    %c0_i32_14 = arith.constant 0 : i32
    %32 = arith.cmpi sgt, %arg1, %c0_i32_14 : i32
    %33 = arith.extui %32 : i1 to i32
    %c0_i32_15 = arith.constant 0 : i32
    %34 = arith.cmpi ne, %33, %c0_i32_15 : i32
    scf.if %34 {
      %c0_21 = arith.constant 0 : index
      %c0_22 = arith.constant 0 : index
      %44 = vector.load %arg9[%c0_21, %c0_22] : memref<8x16xf32, #tpu.memory_space<vmem>>, vector<8x16xf32>
      %45 = arith.addf %44, %28 : vector<8x16xf32>
      %c0_23 = arith.constant 0 : index
      %c0_24 = arith.constant 0 : index
      %46 = vector.load %arg9[%c0_23, %c0_24] : memref<8x16xf32, #tpu.memory_space<vmem>>, vector<8x16xf32>
      tpu.vector_store %arg9[%c0_23, %c0_24], %45 {strides = array<i32>} : memref<8x16xf32, #tpu.memory_space<vmem>>, vector<8x16xf32>,
    } else {
    }
    %c0_16 = arith.constant 0 : index
    %35 = memref.load %arg12[%c0_16] : memref<2xf32, #tpu.memory_space<smem>>
    %36 = arith.addf %35, %14 : f32
    %c0_17 = arith.constant 0 : index
    %37 = memref.load %arg12[%c0_17] : memref<2xf32, #tpu.memory_space<smem>>
    memref.store %36, %arg12[%c0_17] : memref<2xf32, #tpu.memory_space<smem>>
    %c1 = arith.constant 1 : index
    %38 = memref.load %arg12[%c1] : memref<2xf32, #tpu.memory_space<smem>>
    %39 = arith.addf %38, %26 : f32
    %c1_18 = arith.constant 1 : index
    %40 = memref.load %arg12[%c1_18] : memref<2xf32, #tpu.memory_space<smem>>
    memref.store %39, %arg12[%c1_18] : memref<2xf32, #tpu.memory_space<smem>>
    %c0_i32_19 = arith.constant 0 : i32
    %41 = arith.cmpi eq, %arg1, %c0_i32_19 : i32
    %42 = arith.extui %41 : i1 to i32
    %c0_i32_20 = arith.constant 0 : i32
    %43 = arith.cmpi ne, %42, %c0_i32_20 : i32
    scf.if %43 {
      %c0_21 = arith.constant 0 : index
      %44 = memref.load %arg12[%c0_21] : memref<2xf32, #tpu.memory_space<smem>>
      %45 = vector.broadcast %44 : f32 to vector<8x128xf32>
      %c0_22 = arith.constant 0 : index
      %c0_23 = arith.constant 0 : index
      %46 = vector.load %arg10[%c0_22, %c0_23] : memref<8x128xf32, #tpu.memory_space<vmem>>, vector<8x128xf32>
      tpu.vector_store %arg10[%c0_22, %c0_23], %45 {strides = array<i32>} : memref<8x128xf32, #tpu.memory_space<vmem>>, vector<8x128xf32>,
      %c1_24 = arith.constant 1 : index
      %47 = memref.load %arg12[%c1_24] : memref<2xf32, #tpu.memory_space<smem>>
      %48 = vector.broadcast %47 : f32 to vector<8x128xf32>
      %c0_25 = arith.constant 0 : index
      %c0_26 = arith.constant 0 : index
      %49 = vector.load %arg11[%c0_25, %c0_26] : memref<8x128xf32, #tpu.memory_space<vmem>>, vector<8x128xf32>
      tpu.vector_store %arg11[%c0_25, %c0_26], %48 {strides = array<i32>} : memref<8x128xf32, #tpu.memory_space<vmem>>, vector<8x128xf32>,
    } else {
    }
    return
  }
  func.func @transform_0(%arg0: i32, %arg1: i32) -> (i32, i32) {
    %c0_i32 = arith.constant 0 : i32
    %c0_i32_0 = arith.constant 0 : i32
    return %c0_i32, %arg1 : i32, i32
  }
  func.func @transform_1(%arg0: i32, %arg1: i32) -> (i32, i32) {
    %c0_i32 = arith.constant 0 : i32
    return %arg0, %arg1 : i32, i32
  }
  func.func @transform_2(%arg0: i32, %arg1: i32) -> (i32, i32) {
    %c0_i32 = arith.constant 0 : i32
    return %arg0, %arg1 : i32, i32
  }
  func.func @transform_3(%arg0: i32, %arg1: i32) -> (i32, i32) {
    %c0_i32 = arith.constant 0 : i32
    return %arg0, %arg1 : i32, i32
  }
  func.func @transform_4(%arg0: i32, %arg1: i32) -> (i32, i32) {
    %c0_i32 = arith.constant 0 : i32
    %c0_i32_0 = arith.constant 0 : i32
    return %c0_i32, %arg0 : i32, i32
  }
  func.func @transform_5(%arg0: i32, %arg1: i32) -> (i32, i32) {
    %c0_i32 = arith.constant 0 : i32
    %c0_i32_0 = arith.constant 0 : i32
    return %c0_i32, %arg0 : i32, i32
  }
  func.func @transform_6(%arg0: i32, %arg1: i32) -> (i32, i32) {
    %c0_i32 = arith.constant 0 : i32
    %c0_i32_0 = arith.constant 0 : i32
    return %c0_i32, %arg0 : i32, i32
  }
  func.func @transform_7(%arg0: i32, %arg1: i32) -> (i32, i32) {
    %c0_i32 = arith.constant 0 : i32
    %c0_i32_0 = arith.constant 0 : i32
    return %c0_i32, %arg0 : i32, i32
  }
  func.func @transform_8(%arg0: i32, %arg1: i32) -> (i32, i32) {
    %c0_i32 = arith.constant 0 : i32
    %c0_i32_0 = arith.constant 0 : i32
    return %arg0, %c0_i32 : i32, i32
  }
  func.func @transform_9(%arg0: i32, %arg1: i32) -> (i32, i32) {
    %c0_i32 = arith.constant 0 : i32
    %c0_i32_0 = arith.constant 0 : i32
    return %arg0, %c0_i32 : i32, i32
  }
}

</mosaic_0001>

<llo_original>
// kernel: tpu_custom_call.1
$region0: #{tpu_custom_call.1}
  #allocation0 [shape = 'u32[]', space=smem, size = 0x4, offset = 0x4, fixed_abs, tag = 'smem constant byte address 0x4 - core index']
  #allocation1 [shape = 'u32[144,128]{1,0:T(1,128)}', space=vmem, size = 0x12000, scoped, tag = 'internal scratch']
  #allocation2 [shape = 'f32[2]{0:T(128)}', space=smem, size = 0x200, scoped, tag = 'scratch operand']
  %s0 = inlined_call_operand.hbm [shape: f32[8,32], index: 0, kind: input, shape index: {}]
  %s1 = inlined_call_operand.hbm [shape: f32[16,32], index: 1, kind: input, shape index: {}]
  %s2 = inlined_call_operand.hbm [shape: f32[16,32], index: 2, kind: input, shape index: {}]
  %s3 = inlined_call_operand.hbm [shape: f32[16,32], index: 3, kind: input, shape index: {}]
  %s4 = inlined_call_operand.vmem [shape: f32[1,16], index: 4, kind: input, shape index: {}]
  %s5 = inlined_call_operand.vmem [shape: f32[1,16], index: 5, kind: input, shape index: {}]
  %s6 = inlined_call_operand.vmem [shape: f32[1,16], index: 6, kind: input, shape index: {}]
  %s7 = inlined_call_operand.hbm [shape: f32[8,16], index: 7, kind: output, shape index: {0}]
  %s8 = inlined_call_operand.hbm [shape: f32[8,128], index: 8, kind: output, shape index: {1}]
  %s9 = inlined_call_operand.hbm [shape: f32[8,128], index: 9, kind: output, shape index: {2}]
  %10 = xla_tuple %s7, %s8, %s9
  %s11 = sld [smem:[#allocation0]]
  $region82: #{tpu_custom_call.1} parent=0
    _
  %s13 = ssub.s32 1, %s11
  %s14 = scalar_select 0, %s13, %s11
  $region1: #{tpu_custom_call.1} parent=0
    #allocation3 [shape = 'u8[4096]{0}', space=vmem, size = 0x1000, scoped, tag = 'input window, operand 0, single buffered']
    #allocation4 [shape = 's32[1]{0}', space=sflag, size = 0x4, scoped, tag = 'scoped memory for tpu_custom_call.1']
    #allocation5 [shape = 's32[1]{0}', space=sflag, size = 0x4, scoped, tag = 'scoped memory for tpu_custom_call.1']
    #allocation6 [shape = 'u8[8192]{0}', space=vmem, size = 0x2000, scoped, tag = 'input window, operand 1, single buffered']
    #allocation7 [shape = 's32[1]{0}', space=sflag, size = 0x4, scoped, tag = 'scoped memory for tpu_custom_call.1']
    #allocation8 [shape = 'u8[8192]{0}', space=vmem, size = 0x2000, scoped, tag = 'input window, operand 2, single buffered']
    #allocation9 [shape = 'u8[8192]{0}', space=vmem, size = 0x2000, scoped, tag = 'input window, operand 3, single buffered']
    #allocation10 [shape = 's32[1]{0}', space=sflag, size = 0x4, scoped, tag = 'scoped memory for tpu_custom_call.1']
    #allocation11 [shape = 'u8[4096]{0}', space=vmem, size = 0x1000, scoped, tag = 'output window, operand 0, single buffered']
    #allocation12 [shape = 'u8[4096]{0}', space=vmem, size = 0x1000, scoped, tag = 'output window, operand 1, single buffered']
    #allocation13 [shape = 's32[1]{0}', space=sflag, size = 0x4, scoped, tag = 'scoped memory for tpu_custom_call.1']
    #allocation14 [shape = 'u8[4096]{0}', space=vmem, size = 0x1000, scoped, tag = 'output window, operand 2, single buffered']
    %15 = vsyncpa [#allocation4], 0
    %16 = vsyncpa [#allocation7], 0
    %17 = vsyncpa [#allocation10], 0
    %18 = vsyncpa [#allocation5], 0
    %19 = vsyncpa [#allocation13], 0
    // Predicated region
    $region2: #{tpu_custom_call.1} parent=1 // pred_check
      _
    $region3: #{tpu_custom_call.1} parent=1 // pred_check_branch
      %21 = sbr.rel (0) target = $region5
    $region4: #{tpu_custom_call.1} parent=1 // pred_region
      %s23 = ssub.s32 128, 128
      %24 = vsyncadd [#allocation4], %s23
      %s26 = sshll.u32 [#allocation3], 4
      %s27 = int_to_ptr.vmem [resolvable:$true] %s26
      %29 = dma.hbm_to_vmem [thread:$0]  %s0, 128, %s27, [#allocation4]
    $region5: #{tpu_custom_call.1} parent=1 // pred_fallthru
      _
    // Predicated region
    $region6: #{tpu_custom_call.1} parent=1 // pred_check
      _
    $region7: #{tpu_custom_call.1} parent=1 // pred_check_branch
      %31 = sbr.rel (0) target = $region9
    $region8: #{tpu_custom_call.1} parent=1 // pred_region
      %s33 = ssub.s32 256, 256
      %34 = vsyncadd [#allocation7], %s33
      %s35 = sshll.u32 [#allocation6], 4
      %s36 = int_to_ptr.vmem [resolvable:$true] %s35
      %41 = dma.hbm_to_vmem [thread:$0]  %s1, 256, %s36, [#allocation7], 128, 128, 8
    $region9: #{tpu_custom_call.1} parent=1 // pred_fallthru
      _
    // Predicated region
    $region10: #{tpu_custom_call.1} parent=1 // pred_check
      _
    $region11: #{tpu_custom_call.1} parent=1 // pred_check_branch
      %43 = sbr.rel (0) target = $region13
    $region12: #{tpu_custom_call.1} parent=1 // pred_region
      %s45 = ssub.s32 256, 256
      %46 = vsyncadd [#allocation7], %s45
      %s47 = sshll.u32 [#allocation8], 4
      %s48 = int_to_ptr.vmem [resolvable:$true] %s47
      %53 = dma.hbm_to_vmem [thread:$0]  %s2, 256, %s48, [#allocation7], 128, 128, 8
    $region13: #{tpu_custom_call.1} parent=1 // pred_fallthru
      _
    // Predicated region
    $region14: #{tpu_custom_call.1} parent=1 // pred_check
      _
    $region15: #{tpu_custom_call.1} parent=1 // pred_check_branch
      %55 = sbr.rel (0) target = $region17
    $region16: #{tpu_custom_call.1} parent=1 // pred_region
      %s57 = ssub.s32 256, 256
      %58 = vsyncadd [#allocation10], %s57
      %s59 = sshll.u32 [#allocation9], 4
      %s60 = int_to_ptr.vmem [resolvable:$true] %s59
      %65 = dma.hbm_to_vmem [thread:$0]  %s3, 256, %s60, [#allocation10], 128, 128, 8
    $region17: #{tpu_custom_call.1} parent=1 // pred_fallthru
      _
    // Predicated region
    $region18: #{tpu_custom_call.1} parent=1 // pred_check
      _
    $region19: #{tpu_custom_call.1} parent=1 // pred_check_branch
      %67 = sbr.rel (0) target = $region21
    $region20: #{tpu_custom_call.1} parent=1 // pred_region
      _
    $region21: #{tpu_custom_call.1} parent=1 // pred_fallthru
      _
    // Predicated region
    $region22: #{tpu_custom_call.1} parent=1 // pred_check
      _
    $region23: #{tpu_custom_call.1} parent=1 // pred_check_branch
      %69 = sbr.rel (0) target = $region25
    $region24: #{tpu_custom_call.1} parent=1 // pred_region
      _
    $region25: #{tpu_custom_call.1} parent=1 // pred_fallthru
      _
    // Predicated region
    $region26: #{tpu_custom_call.1} parent=1 // pred_check
      _
    $region27: #{tpu_custom_call.1} parent=1 // pred_check_branch
      %71 = sbr.rel (0) target = $region29
    $region28: #{tpu_custom_call.1} parent=1 // pred_region
      _
    $region29: #{tpu_custom_call.1} parent=1 // pred_fallthru
      _
    // Predicated region
    $region30: #{tpu_custom_call.1} parent=1 // pred_check
      _
    $region31: #{tpu_custom_call.1} parent=1 // pred_check_branch
      %73 = sbr.rel (0) target = $region33
    $region32: #{tpu_custom_call.1} parent=1 // pred_region
      %74 = dma.done [#allocation4], 128
    $region33: #{tpu_custom_call.1} parent=1 // pred_fallthru
      _
    // Predicated region
    $region34: #{tpu_custom_call.1} parent=1 // pred_check
      _
    $region35: #{tpu_custom_call.1} parent=1 // pred_check_branch
      %76 = sbr.rel (0) target = $region37
    $region36: #{tpu_custom_call.1} parent=1 // pred_region
      %77 = dma.done [#allocation7], 256
    $region37: #{tpu_custom_call.1} parent=1 // pred_fallthru
      _
    // Predicated region
    $region38: #{tpu_custom_call.1} parent=1 // pred_check
      _
    $region39: #{tpu_custom_call.1} parent=1 // pred_check_branch
      %79 = sbr.rel (0) target = $region41
    $region40: #{tpu_custom_call.1} parent=1 // pred_region
      %80 = dma.done [#allocation7], 256
    $region41: #{tpu_custom_call.1} parent=1 // pred_fallthru
      _
    // Predicated region
    $region42: #{tpu_custom_call.1} parent=1 // pred_check
      _
    $region43: #{tpu_custom_call.1} parent=1 // pred_check_branch
      %82 = sbr.rel (0) target = $region45
    $region44: #{tpu_custom_call.1} parent=1 // pred_region
      %83 = dma.done [#allocation10], 256
    $region45: #{tpu_custom_call.1} parent=1 // pred_fallthru
      _
    %v84 = vld [vmem:[#allocation6] sm:$0xff]
    %v85 = vld [vmem:[#allocation6 + $0x8] sm:$0xff]
    %v86 = vld [vmem:[#allocation8] sm:$0xff]
    %v87 = vld [vmem:[#allocation8 + $0x8] sm:$0xff]
    %v88 = vld [vmem:[#allocation9] sm:$0xff]
    %v89 = vld [vmem:[#allocation9 + $0x8] sm:$0xff]
    %v90 = vmul.f32 %v86, 1.442695
    %v91 = vpow.pop %v90
    %v92 = vmul.f32 %v87, 1.442695
    %v93 = vpow.pop %v92
    %v94 = vadd.f32 %v91, 1.0
    %v95 = vlog2.pop %v94
    %v96 = vmul.f32 %v95, 0.6931472
    %v97 = vmul.f32 -0.5, %v91
    %v98 = vadd.f32 %v97, 1.0
    %v99 = vmul.f32 %v98, %v91
    %v100 = vand.u32 2147483647, %v91
    %vm101 = vcmp.lt.f32.partialorder %v100, 0.0004427343
    %v102 = vsel %vm101, %v99, %v96
    %v103 = vadd.f32 %v93, 1.0
    %v104 = vlog2.pop %v103
    %v105 = vmul.f32 %v104, 0.6931472
    %v106 = vmul.f32 -0.5, %v93
    %v107 = vadd.f32 %v106, 1.0
    %v108 = vmul.f32 %v107, %v93
    %v109 = vand.u32 2147483647, %v93
    %vm110 = vcmp.lt.f32.partialorder %v109, 0.0004427343
    %v111 = vsel %vm110, %v108, %v105
    %v112 = vmul.f32 %v102, %v88
    %v113 = vmul.f32 %v111, %v89
    %v114 = vadd.f32 %v84, %v112
    %v115 = vadd.f32 %v85, %v113
    %v116 = vsub.f32 %v114, 0.5
    %v117 = vsub.f32 %v115, 0.5
    %v118 = vmul.f32 %v116, %v116
    %v119 = vmul.f32 %v117, %v117
    %vm120 = vcmask 261120
    %v121 = vsel %vm120, %v118, 0.0
    %v122 = vsel %vm120, %v119, 0.0
    %v123 = vadd.f32 %v121, %v122
    %124 = vadd.xlane.f32.xlu0 %v123
    %v125 = vpop.xlane.xlu0 %124
    %v126 = vrot.slane %v125, 4
    %v127 = vadd.f32 %v125, %v126
    %v128 = vrot.slane %v127, 2
    %v129 = vadd.f32 %v127, %v128
    %v130 = vrot.slane %v129, 1
    %v131 = vadd.f32 %v129, %v130
    %s132 = vtos %v131
    %s133 = smul.f32 %s132, -0.5
    %v134 = vmul.f32 %v88, %v88
    %v135 = vmul.f32 %v89, %v89
    %v136 = vsel %vm120, %v134, 0.0
    %v137 = vsel %vm120, %v135, 0.0
    %v138 = vadd.f32 %v136, %v137
    %139 = vadd.xlane.f32.xlu0 %v138
    %v140 = vpop.xlane.xlu0 %139
    %v141 = vrot.slane %v140, 4
    %v142 = vadd.f32 %v140, %v141
    %v143 = vrot.slane %v142, 2
    %v144 = vadd.f32 %v142, %v143
    %v145 = vrot.slane %v144, 1
    %v146 = vadd.f32 %v144, %v145
    %s147 = vtos %v146
    %s148 = smul.f32 %s147, -0.5
    %v149 = vlog2.pop %v102
    %v150 = vmul.f32 %v149, 0.6931472
    %v151 = vlog2.pop %v111
    %v152 = vmul.f32 %v151, 0.6931472
    %v153 = vsel %vm120, %v150, 0.0
    %v154 = vsel %vm120, %v152, 0.0
    %v155 = vadd.f32 %v153, %v154
    %156 = vadd.xlane.f32.xlu0 %v155
    %v157 = vpop.xlane.xlu0 %156
    %v158 = vrot.slane %v157, 4
    %v159 = vadd.f32 %v157, %v158
    %v160 = vrot.slane %v159, 2
    %v161 = vadd.f32 %v159, %v160
    %v162 = vrot.slane %v161, 1
    %v163 = vadd.f32 %v161, %v162
    %s164 = vtos %v163
    %s165 = ssub.f32 %s148, %s164
    %v166 = vld [vmem:[#allocation3] sm:$0xff]
    %v168 = vsel %vm120, %v166, 0
    %v171 = vsel %vm120, %v114, 0
    %v174 = vsel %vm120, %v115, 0
    %176 = vmatprep.subr.mxu0 0.0
    %177 = vmatpush1.xpose.msra.mxu0 0.0
    %178 = vmatprep.subr.mxu0 0.0
    %179 = vmatpush1.xpose.msra.mxu0 0.0
    %180 = vmatprep.subr.mxu0 0.0
    %181 = vmatpush1.xpose.msra.mxu0 0.0
    %182 = vmatprep.subr.mxu0 0.0
    %183 = vmatpush1.xpose.msra.mxu0 0.0
    %184 = vmatprep.subr.mxu0 0.0
    %185 = vmatpush1.xpose.msra.mxu0 0.0
    %186 = vmatprep.subr.mxu0 0.0
    %187 = vmatpush1.xpose.msra.mxu0 0.0
    %188 = vmatprep.subr.mxu0 0.0
    %189 = vmatpush1.xpose.msra.mxu0 0.0
    %190 = vmatprep.subr.mxu0 0.0
    %191 = vmatpush1.xpose.msra.mxu0 0.0
    %192 = vmatprep.subr.mxu0 0.0
    %193 = vmatpush1.xpose.msra.mxu0 0.0
    %194 = vmatprep.subr.mxu0 0.0
    %195 = vmatpush1.xpose.msra.mxu0 0.0
    %196 = vmatprep.subr.mxu0 0.0
    %197 = vmatpush1.xpose.msra.mxu0 0.0
    %198 = vmatprep.subr.mxu0 0.0
    %199 = vmatpush1.xpose.msra.mxu0 0.0
    %200 = vmatprep.subr.mxu0 0.0
    %201 = vmatpush1.xpose.msra.mxu0 0.0
    %202 = vmatprep.subr.mxu0 0.0
    %203 = vmatpush1.xpose.msra.mxu0 0.0
    %204 = vmatprep.subr.mxu0 0.0
    %205 = vmatpush1.xpose.msra.mxu0 %v174
    %206 = vmatprep.subr.mxu0 0.0
    %207 = vmatpush1.xpose.msra.mxu0 %v171
    %208 = vmatprep.subr.mxu0 0.0
    %209 = vmatpush2.xpose.msra.mxu0 0.0
    %210 = vmatprep.subr.mxu0 0.0
    %211 = vmatpush2.xpose.msra.mxu0 0.0
    %212 = vmatprep.subr.mxu0 0.0
    %213 = vmatpush2.xpose.msra.mxu0 0.0
    %214 = vmatprep.subr.mxu0 0.0
    %215 = vmatpush2.xpose.msra.mxu0 0.0
    %216 = vmatprep.subr.mxu0 0.0
    %217 = vmatpush2.xpose.msra.mxu0 0.0
    %218 = vmatprep.subr.mxu0 0.0
    %219 = vmatpush2.xpose.msra.mxu0 0.0
    %220 = vmatprep.subr.mxu0 0.0
    %221 = vmatpush2.xpose.msra.mxu0 0.0
    %222 = vmatprep.subr.mxu0 0.0
    %223 = vmatpush2.xpose.msra.mxu0 0.0
    %224 = vmatprep.subr.mxu0 0.0
    %225 = vmatpush2.xpose.msra.mxu0 0.0
    %226 = vmatprep.subr.mxu0 0.0
    %227 = vmatpush2.xpose.msra.mxu0 0.0
    %228 = vmatprep.subr.mxu0 0.0
    %229 = vmatpush2.xpose.msra.mxu0 0.0
    %230 = vmatprep.subr.mxu0 0.0
    %231 = vmatpush2.xpose.msra.mxu0 0.0
    %232 = vmatprep.subr.mxu0 0.0
    %233 = vmatpush2.xpose.msra.mxu0 0.0
    %234 = vmatprep.subr.mxu0 0.0
    %235 = vmatpush2.xpose.msra.mxu0 0.0
    %236 = vmatprep.subr.mxu0 0.0
    %237 = vmatpush2.xpose.msra.mxu0 0.0
    %238 = vmatprep.subr.mxu0 0.0
    %239 = vmatpush2.xpose.msra.mxu0 0.0
    %240 = vmatprep.mubr.f32.mxu0 0.0
    %241 = vmatmul.mubr.f32.gmra.mxu0 %v168
    %v242 = vpop.f32.mrf.mxu0
    %v243 = vadd.f32 0.0, %v242
    %v244 = vpop.f32.mrf.mxu0
    %245 = vdwg.mxu0
    %p246 = scmp.eq.s32.totalorder 0, 0
    // Predicated region
    $region46: #{tpu_custom_call.1} parent=1 // pred_check
      %p247 = pneg %p246
    $region47: #{tpu_custom_call.1} parent=1 // pred_check_branch
      %249 = sbr.rel (%p247) target = $region49
    $region48: #{tpu_custom_call.1} parent=1 // pred_region
      %v250 = vld [vmem:[%s4] sm:$0x1]
      %v251 = vld [vmem:[%s5] sm:$0x1]
      %v252 = vld [vmem:[%s6] sm:$0x1]
      %v253 = vmul.f32 %v251, 1.442695
      %v254 = vpow.pop %v253
      %v255 = vadd.f32 %v254, 1.0
      %v256 = vlog2.pop %v255
      %v257 = vmul.f32 %v256, 0.6931472
      %v258 = vmul.f32 -0.5, %v254
      %v259 = vadd.f32 %v258, 1.0
      %v260 = vmul.f32 %v259, %v254
      %v261 = vand.u32 2147483647, %v254
      %vm262 = vcmp.lt.f32.partialorder %v261, 0.0004427343
      %v263 = vsel %vm262, %v260, %v257
      %v264 = vmul.f32 %v263, %v252
      %v265 = vadd.f32 %v250, %v264
      %v266 = vsub.f32 %v265, 0.5
      %v267 = vmul.f32 %v266, %v266
      %vm268 = vcmask 122880
      %v269 = vsel %vm268, %v267, 0.0
      %270 = vadd.xlane.f32.xlu0 %v269
      %v271 = vpop.xlane.xlu0 %270
      %v272 = vrot.slane %v271, 4
      %v273 = vadd.f32 %v271, %v272
      %v274 = vrot.slane %v273, 2
      %v275 = vadd.f32 %v273, %v274
      %v276 = vrot.slane %v275, 1
      %v277 = vadd.f32 %v275, %v276
      %s278 = vtos %v277
      %s279 = smul.f32 %s278, -0.5
      %s280 = scalar_lea.smem [#allocation2], 0
      %281 = sst [smem:[%s280]] %s279
      %v282 = vmul.f32 %v252, %v252
      %v283 = vsel %vm268, %v282, 0.0
      %284 = vadd.xlane.f32.xlu0 %v283
      %v285 = vpop.xlane.xlu0 %284
      %v286 = vrot.slane %v285, 4
      %v287 = vadd.f32 %v285, %v286
      %v288 = vrot.slane %v287, 2
      %v289 = vadd.f32 %v287, %v288
      %v290 = vrot.slane %v289, 1
      %v291 = vadd.f32 %v289, %v290
      %s292 = vtos %v291
      %s293 = smul.f32 %s292, -0.5
      %v294 = vlog2.pop %v263
      %v295 = vmul.f32 %v294, 0.6931472
      %v296 = vsel %vm268, %v295, 0.0
      %297 = vadd.xlane.f32.xlu0 %v296
      %v298 = vpop.xlane.xlu0 %297
      %v299 = vrot.slane %v298, 4
      %v300 = vadd.f32 %v298, %v299
      %v301 = vrot.slane %v300, 2
      %v302 = vadd.f32 %v300, %v301
      %v303 = vrot.slane %v302, 1
      %v304 = vadd.f32 %v302, %v303
      %s305 = vtos %v304
      %s306 = ssub.f32 %s293, %s305
      %s307 = scalar_lea.smem [#allocation2], 1
      %308 = sst [smem:[%s307]] %s306
      %v310 = vlaneseq
      %v311 = vshrl.u32 %v310, 7
      %v312 = vsub.s32 0, %v311
      %v313 = vrot.slane %v265, %v312
      %v315 = vadd.f32 %v243, %v313
      %vm316 = vcmask 130048
      %317 = vst.msk [vmem:[#allocation11] sm:$0xff] %vm316, %v315
    $region49: #{tpu_custom_call.1} parent=1 // pred_fallthru
      _
    %p318 = scmp.gt.s32.totalorder 0, 0
    // Predicated region
    $region50: #{tpu_custom_call.1} parent=1 // pred_check
      %p319 = pneg %p318
    $region51: #{tpu_custom_call.1} parent=1 // pred_check_branch
      %321 = sbr.rel (%p319) target = $region53
    $region52: #{tpu_custom_call.1} parent=1 // pred_region
      %v322 = vld [vmem:[#allocation11] sm:$0xff]
      %v323 = vadd.f32 %v322, %v243
      %vm324 = vcmask 130048
      %325 = vst.msk [vmem:[#allocation11] sm:$0xff] %vm324, %v323
    $region53: #{tpu_custom_call.1} parent=1 // pred_fallthru
      _
    %s326 = sld [smem:[#allocation2]]
    %s327 = sadd.f32 %s326, %s133
    %s328 = scalar_lea.smem [#allocation2], 0
    %329 = sst [smem:[%s328]] %s327
    %s330 = sld [smem:[#allocation2 + $0x1]]
    %s331 = sadd.f32 %s330, %s165
    %s332 = scalar_lea.smem [#allocation2], 1
    %333 = sst [smem:[%s332]] %s331
    // Predicated region
    $region54: #{tpu_custom_call.1} parent=1 // pred_check
      %p334 = pneg %p246
    $region55: #{tpu_custom_call.1} parent=1 // pred_check_branch
      %336 = sbr.rel (%p334) target = $region57
    $region56: #{tpu_custom_call.1} parent=1 // pred_region
      %s337 = sld [smem:[#allocation2]]
      %v338 = vstv %s337
      %339 = vst [vmem:[#allocation12] sm:$0xff] %v338
      %s340 = sld [smem:[#allocation2 + $0x1]]
      %v341 = vstv %s340
      %342 = vst [vmem:[#allocation14] sm:$0xff] %v341
    $region57: #{tpu_custom_call.1} parent=1 // pred_fallthru
      _
    // Predicated region
    $region58: #{tpu_custom_call.1} parent=1 // pred_check
      _
    $region59: #{tpu_custom_call.1} parent=1 // pred_check_branch
      %344 = sbr.rel (0) target = $region61
    $region60: #{tpu_custom_call.1} parent=1 // pred_region
      %s346 = ssub.s32 128, 128
      %347 = vsyncadd [#allocation5], %s346
      %s349 = sshll.u32 [#allocation11], 4
      %s350 = int_to_ptr.vmem [resolvable:$true] %s349
      %352 = dma.vmem_to_hbm [thread:$0]  %s350, 128, %s7, [#allocation5]
    $region61: #{tpu_custom_call.1} parent=1 // pred_fallthru
      _
    // Predicated region
    $region62: #{tpu_custom_call.1} parent=1 // pred_check
      _
    $region63: #{tpu_custom_call.1} parent=1 // pred_check_branch
      %354 = sbr.rel (0) target = $region65
    $region64: #{tpu_custom_call.1} parent=1 // pred_region
      %s356 = ssub.s32 128, 128
      %357 = vsyncadd [#allocation13], %s356
      %s359 = sshll.u32 [#allocation12], 4
      %s360 = int_to_ptr.vmem [resolvable:$true] %s359
      %362 = dma.vmem_to_hbm [thread:$0]  %s360, 128, %s8, [#allocation13]
    $region65: #{tpu_custom_call.1} parent=1 // pred_fallthru
      _
    // Predicated region
    $region66: #{tpu_custom_call.1} parent=1 // pred_check
      _
    $region67: #{tpu_custom_call.1} parent=1 // pred_check_branch
      %364 = sbr.rel (0) target = $region69
    $region68: #{tpu_custom_call.1} parent=1 // pred_region
      %s366 = ssub.s32 128, 128
      %367 = vsyncadd [#allocation13], %s366
      %s369 = sshll.u32 [#allocation14], 4
      %s370 = int_to_ptr.vmem [resolvable:$true] %s369
      %372 = dma.vmem_to_hbm [thread:$0]  %s370, 128, %s9, [#allocation13]
    $region69: #{tpu_custom_call.1} parent=1 // pred_fallthru
      _
    // Predicated region
    $region70: #{tpu_custom_call.1} parent=1 // pred_check
      _
    $region71: #{tpu_custom_call.1} parent=1 // pred_check_branch
      %374 = sbr.rel (0) target = $region73
    $region72: #{tpu_custom_call.1} parent=1 // pred_region
      %375 = dma.done [#allocation5], 128
    $region73: #{tpu_custom_call.1} parent=1 // pred_fallthru
      _
    // Predicated region
    $region74: #{tpu_custom_call.1} parent=1 // pred_check
      _
    $region75: #{tpu_custom_call.1} parent=1 // pred_check_branch
      %377 = sbr.rel (0) target = $region77
    $region76: #{tpu_custom_call.1} parent=1 // pred_region
      %378 = dma.done [#allocation13], 128
    $region77: #{tpu_custom_call.1} parent=1 // pred_fallthru
      _
    // Predicated region
    $region78: #{tpu_custom_call.1} parent=1 // pred_check
      _
    $region79: #{tpu_custom_call.1} parent=1 // pred_check_branch
      %380 = sbr.rel (0) target = $region81
    $region80: #{tpu_custom_call.1} parent=1 // pred_region
      %381 = dma.done [#allocation13], 128
    $region81: #{tpu_custom_call.1} parent=1 // pred_fallthru
      _
    %382 = vsyncpa [#allocation4], 1
    %383 = vsyncpa [#allocation7], 1
    %384 = vsyncpa [#allocation10], 1
    %385 = vsyncpa [#allocation5], 1
    %386 = vsyncpa [#allocation13], 1

</llo_original>
